<compile_context>
chip_gen: v7x
topology: tpu7x:2x2x1
jax: 0.10.0
libtpu: 0.0.40
codegen_flags: <defaults>
</compile_context>

<pallas_src>
import functools

import jax
import jax.numpy as jnp
from jax.experimental import pallas as pl
from jax.experimental.pallas import tpu as pltpu


def _round_up(n, m):
    return ((n + m - 1) // m) * m


def mlp_kernel(x_ref, w1_ref, b1_ref, w2_ref, b2_ref, o_ref, *, bf16_compute):
    x = x_ref[...]
    if bf16_compute:
        # bf16 MXU inputs, f32 accumulation via preferred_element_type.
        x = x.astype(jnp.bfloat16)
        h = jnp.dot(x, w1_ref[...], preferred_element_type=jnp.float32)
    else:
        h = jnp.dot(x, w1_ref[...], preferred_element_type=jnp.float32,
                    precision=jax.lax.Precision.HIGHEST)
    h = h + b1_ref[...]                       # (TM, H) + (1, H), f32 epilogue
    h = jnp.maximum(h, 0.0)                   # ReLU
    # dropout_rate = 0.0 -> identity (no masking / scaling)
    if bf16_compute:
        h = h.astype(jnp.bfloat16)
        out = jnp.dot(h, w2_ref[...], preferred_element_type=jnp.float32)
    else:
        out = jnp.dot(h, w2_ref[...], preferred_element_type=jnp.float32,
                      precision=jax.lax.Precision.HIGHEST)
    out = out + b2_ref[...]                   # (TM, O_pad) + (1, O_pad), f32
    o_ref[...] = out.astype(o_ref.dtype)


def mlp_forward(x, w1, b1, w2, b2, *, bf16_compute=True):
    """x: (B, C, H, W) or (B, D). Returns (B, output_dim) float32."""
    B = x.shape[0]
    x2d = x.reshape(B, -1)                    # x.view(x.size(0), -1)
    D = x2d.shape[1]
    Hd = w1.shape[1]
    Od = w2.shape[1]

    # --- Lane-pad the output feature dim to a 128 multiple -> unmasked vst. ---
    Od_pad = _round_up(Od, 128)
    if Od_pad != Od:
        w2 = jnp.pad(w2, ((0, 0), (0, Od_pad - Od)))
        b2 = jnp.pad(b2, ((0, Od_pad - Od),))

    w_dtype = jnp.bfloat16 if bf16_compute else jnp.float32
    w1c = w1.astype(w_dtype)                  # one-time cast; weights are small
    w2c = w2.astype(w_dtype)
    b1_2d = b1.reshape(1, Hd).astype(jnp.float32)
    b2_2d = b2.reshape(1, Od_pad).astype(jnp.float32)

    # --- Batch tile: as big as possible (cap 512) to amortize per-step overhead,
    # while aiming for >= 2 tiles so the "parallel" axis can feed both v7x TCs. --
    if B > 512:
        TM = 512
    else:
        TM = _round_up(max(-(-B // 2), 8), 8)     # >= 8 sublanes (f32)
    n_tiles = pl.cdiv(B, TM)                      # ragged last block handled by Pallas

    # --- VMEM budget (double-buffered x/out + weights/biases) + headroom. ------
    x_isz = x2d.dtype.itemsize
    w_isz = jnp.dtype(w_dtype).itemsize
    vmem_need = 2 * (TM * D * x_isz + TM * Od_pad * 4
                     + D * Hd * w_isz + Hd * Od_pad * w_isz
                     + (Hd + Od_pad) * 4)
    vmem_limit = int(min(vmem_need + (8 << 20), 64 << 20))

    cost = pl.CostEstimate(
        flops=2 * B * (D * Hd + Hd * Od_pad),
        transcendentals=0,
        bytes_accessed=(B * D * x_isz
                        + (D * Hd + Hd * Od_pad) * w_isz
                        + (Hd + Od_pad) * 4
                        + B * Od_pad * 4),
    )

    kernel = functools.partial(mlp_kernel, bf16_compute=bf16_compute)

    out_padded = pl.pallas_call(
        kernel,
        out_shape=jax.ShapeDtypeStruct((B, Od_pad), jnp.float32),
        grid=(n_tiles,),
        in_specs=[
            pl.BlockSpec((TM, D), lambda i: (i, 0)),        # x: batch-tiled
            pl.BlockSpec((D, Hd), lambda i: (0, 0)),        # w1: VMEM-resident
            pl.BlockSpec((1, Hd), lambda i: (0, 0)),        # b1: VMEM-resident
            pl.BlockSpec((Hd, Od_pad), lambda i: (0, 0)),   # w2: VMEM-resident
            pl.BlockSpec((1, Od_pad), lambda i: (0, 0)),    # b2: VMEM-resident
        ],
        out_specs=pl.BlockSpec((TM, Od_pad), lambda i: (i, 0)),
        compiler_params=pltpu.CompilerParams(
            dimension_semantics=("parallel",),              # batch tiles across TCs (v7x)
            vmem_limit_bytes=vmem_limit,
        ),
        cost_estimate=cost,
    )(x2d, w1c, b1_2d, w2c, b2_2d)

    # Strip the lane padding (tiny (B, Od) copy; consumers that can handle the
    # 128-lane slab should use out_padded directly).
    return out_padded[:, :Od]


def init_params(key, input_dim=256, hidden_dim=128, output_dim=10):
    """Deterministic init mimicking nn.Linear's U(-1/sqrt(fan_in), 1/sqrt(fan_in))."""
    k1, k2, k3, k4 = jax.random.split(key, 4)
    bound1 = 1.0 / jnp.sqrt(input_dim)
    bound2 = 1.0 / jnp.sqrt(hidden_dim)
    # Stored transposed relative to PyTorch (out,in) -> (in,out) for x @ W.
    w1 = jax.random.uniform(k1, (input_dim, hidden_dim), jnp.float32, -bound1, bound1)
    b1 = jax.random.uniform(k2, (hidden_dim,), jnp.float32, -bound1, bound1)
    w2 = jax.random.uniform(k3, (hidden_dim, output_dim), jnp.float32, -bound2, bound2)
    b2 = jax.random.uniform(k4, (output_dim,), jnp.float32, -bound2, bound2)
    return w1, b1, w2, b2


if __name__ == "__main__":
    key = jax.random.PRNGKey(0)
    kx, kp = jax.random.split(key)

    # Small NCHW-like input whose flattened size equals input_dim=256.
    B, C, H, W = 2, 1, 16, 16            # 1*16*16 = 256
    x = jax.random.normal(kx, (B, C, H, W), jnp.float32)

    w1, b1, w2, b2 = init_params(kp, input_dim=256, hidden_dim=128, output_dim=10)

    out = mlp_forward(x, w1, b1, w2, b2)   # bf16 matmul inputs, f32 accumulate
    jax.block_until_ready(out)

    # Reference check in plain f32 JAX. Tolerance accounts for bf16 MXU inputs
    # (use mlp_forward(..., bf16_compute=False) for strict f32 parity).
    x2d = x.reshape(B, -1)
    ref = jnp.maximum(x2d @ w1 + b1, 0.0) @ w2 + b2
    assert out.shape == (B, 10)
    assert jnp.allclose(out, ref, atol=5e-2, rtol=5e-2), \
        float(jnp.max(jnp.abs(out - ref)))

    print("KERNEL_OK")
</pallas_src>

<mosaic_0001>
module attributes {stable_mosaic.version = 11 : i64} {
  func.func @mlp_kernel(%arg0: i32, %arg1: memref<8x256xf32, #tpu.memory_space<vmem>>, %arg2: memref<256x128xbf16, #tpu.memory_space<vmem>>, %arg3: memref<1x128xf32, #tpu.memory_space<vmem>>, %arg4: memref<128x128xbf16, #tpu.memory_space<vmem>>, %arg5: memref<1x128xf32, #tpu.memory_space<vmem>>, %arg6: memref<8x128xf32, #tpu.memory_space<vmem>>) attributes {dimension_semantics = [#tpu.dimension_semantics<parallel>], iteration_bounds = array<i64: 1>, scalar_prefetch = 0 : i64, scratch_operands = 0 : i64, tpu.core_type = #tpu.core_type<tc>, window_params = [{transform_indices = @transform_0, window_bounds = array<i64: 8, 256>}, {pipeline_mode = #tpu.pipeline_mode<synchronous>, transform_indices = @transform_1, window_bounds = array<i64: 256, 128>}, {pipeline_mode = #tpu.pipeline_mode<synchronous>, transform_indices = @transform_2, window_bounds = array<i64: 1, 128>}, {pipeline_mode = #tpu.pipeline_mode<synchronous>, transform_indices = @transform_3, window_bounds = array<i64: 128, 128>}, {pipeline_mode = #tpu.pipeline_mode<synchronous>, transform_indices = @transform_4, window_bounds = array<i64: 1, 128>}, {transform_indices = @transform_5, window_bounds = array<i64: 8, 128>}]} {
    %c0 = arith.constant 0 : index
    %c0_0 = arith.constant 0 : index
    %0 = vector.load %arg1[%c0, %c0_0] : memref<8x256xf32, #tpu.memory_space<vmem>>, vector<8x256xf32>
    %1 = arith.truncf %0 : vector<8x256xf32> to vector<8x256xbf16>
    %c0_1 = arith.constant 0 : index
    %c0_2 = arith.constant 0 : index
    %2 = vector.load %arg2[%c0_1, %c0_2] : memref<256x128xbf16, #tpu.memory_space<vmem>>, vector<256x128xbf16>
    %cst = arith.constant dense<0.000000e+00> : vector<8x128xf32>
    %3 = tpu.matmul %1, %2, %cst {dimension_numbers = #tpu.dot_dimension_numbers<[1], [0], [0], [1], [0, 0, 1, 1], [], []>} : vector<8x256xbf16>, vector<256x128xbf16>, vector<8x128xf32> -> vector<8x128xf32>
    %c0_3 = arith.constant 0 : index
    %c0_4 = arith.constant 0 : index
    %4 = vector.load %arg3[%c0_3, %c0_4] : memref<1x128xf32, #tpu.memory_space<vmem>>, vector<1x128xf32>
    %5 = vector.broadcast %4 : vector<1x128xf32> to vector<8x128xf32>
    %6 = arith.addf %3, %5 : vector<8x128xf32>
    %cst_5 = arith.constant 0.000000e+00 : f32
    %7 = vector.broadcast %cst_5 : f32 to vector<8x128xf32>
    %8 = arith.maximumf %6, %7 : vector<8x128xf32>
    %9 = arith.truncf %8 : vector<8x128xf32> to vector<8x128xbf16>
    %c0_6 = arith.constant 0 : index
    %c0_7 = arith.constant 0 : index
    %10 = vector.load %arg4[%c0_6, %c0_7] : memref<128x128xbf16, #tpu.memory_space<vmem>>, vector<128x128xbf16>
    %cst_8 = arith.constant dense<0.000000e+00> : vector<8x128xf32>
    %11 = tpu.matmul %9, %10, %cst_8 {dimension_numbers = #tpu.dot_dimension_numbers<[1], [0], [0], [1], [0, 0, 1, 1], [], []>} : vector<8x128xbf16>, vector<128x128xbf16>, vector<8x128xf32> -> vector<8x128xf32>
    %c0_9 = arith.constant 0 : index
    %c0_10 = arith.constant 0 : index
    %12 = vector.load %arg5[%c0_9, %c0_10] : memref<1x128xf32, #tpu.memory_space<vmem>>, vector<1x128xf32>
    %13 = vector.broadcast %12 : vector<1x128xf32> to vector<8x128xf32>
    %14 = arith.addf %11, %13 : vector<8x128xf32>
    %c0_11 = arith.constant 0 : index
    %c0_12 = arith.constant 0 : index
    %15 = vector.load %arg6[%c0_11, %c0_12] : memref<8x128xf32, #tpu.memory_space<vmem>>, vector<8x128xf32>
    tpu.vector_store %arg6[%c0_11, %c0_12], %14 {strides = array<i32>} : memref<8x128xf32, #tpu.memory_space<vmem>>, vector<8x128xf32>,
    return
  }
  func.func @transform_0(%arg0: i32) -> (i32, i32) {
    %c0_i32 = arith.constant 0 : i32
    %c0_i32_0 = arith.constant 0 : i32
    return %arg0, %c0_i32 : i32, i32
  }
  func.func @transform_1(%arg0: i32) -> (i32, i32) {
    %c0_i32 = arith.constant 0 : i32
    %c0_i32_0 = arith.constant 0 : i32
    %c0_i32_1 = arith.constant 0 : i32
    return %c0_i32, %c0_i32_0 : i32, i32
  }
  func.func @transform_2(%arg0: i32) -> (i32, i32) {
    %c0_i32 = arith.constant 0 : i32
    %c0_i32_0 = arith.constant 0 : i32
    %c0_i32_1 = arith.constant 0 : i32
    return %c0_i32, %c0_i32_0 : i32, i32
  }
  func.func @transform_3(%arg0: i32) -> (i32, i32) {
    %c0_i32 = arith.constant 0 : i32
    %c0_i32_0 = arith.constant 0 : i32
    %c0_i32_1 = arith.constant 0 : i32
    return %c0_i32, %c0_i32_0 : i32, i32
  }
  func.func @transform_4(%arg0: i32) -> (i32, i32) {
    %c0_i32 = arith.constant 0 : i32
    %c0_i32_0 = arith.constant 0 : i32
    %c0_i32_1 = arith.constant 0 : i32
    return %c0_i32, %c0_i32_0 : i32, i32
  }
  func.func @transform_5(%arg0: i32) -> (i32, i32) {
    %c0_i32 = arith.constant 0 : i32
    %c0_i32_0 = arith.constant 0 : i32
    return %arg0, %c0_i32 : i32, i32
  }
}

</mosaic_0001>

<llo_original>
// kernel: tpu_custom_call.1
$region0: #{tpu_custom_call.1}
  #allocation0 [shape = 'u32[]', space=smem, size = 0x4, offset = 0x4, fixed_abs, tag = 'smem constant byte address 0x4 - core index']
  #allocation1 [shape = 'u32[144,128]{1,0:T(1,128)}', space=vmem, size = 0x12000, scoped, tag = 'internal scratch']
  %s0 = inlined_call_operand.hbm [shape: f32[2,256], index: 0, kind: input, shape index: {}]
  %s1 = inlined_call_operand.hbm [shape: bf16[256,128], index: 1, kind: input, shape index: {}]
  %s2 = inlined_call_operand.vmem [shape: f32[1,128], index: 2, kind: input, shape index: {}]
  %s3 = inlined_call_operand.hbm [shape: bf16[128,128], index: 3, kind: input, shape index: {}]
  %s4 = inlined_call_operand.vmem [shape: f32[1,128], index: 4, kind: input, shape index: {}]
  %s5 = inlined_call_operand.hbm [shape: f32[2,128], index: 5, kind: output, shape index: {}]
  %s6 = sld [smem:[#allocation0]]
  $region42: #{tpu_custom_call.1} parent=0
    _
  %s8 = ssub.s32 1, %s6
  %s9 = scalar_select 0, %s8, %s6
  $region1: #{tpu_custom_call.1} parent=0
    #allocation2 [shape = 'u8[8192]{0}', space=vmem, size = 0x2000, scoped, tag = 'input window, operand 0, single buffered']
    #allocation3 [shape = 's32[1]{0}', space=sflag, size = 0x4, scoped, tag = 'scoped memory for tpu_custom_call.1']
    #allocation4 [shape = 's32[1]{0}', space=sflag, size = 0x4, scoped, tag = 'scoped memory for tpu_custom_call.1']
    #allocation5 [shape = 'u8[65536]{0}', space=vmem, size = 0x10000, scoped, tag = 'input window, operand 1, single buffered']
    #allocation6 [shape = 's32[1]{0}', space=sflag, size = 0x4, scoped, tag = 'scoped memory for tpu_custom_call.1']
    #allocation7 [shape = 'u8[32768]{0}', space=vmem, size = 0x8000, scoped, tag = 'input window, operand 3, single buffered']
    #allocation8 [shape = 'u8[4096]{0}', space=vmem, size = 0x1000, scoped, tag = 'output window, operand 0, single buffered']
    %10 = vsyncpa [#allocation3], 0
    %11 = vsyncpa [#allocation6], 0
    %12 = vsyncpa [#allocation4], 0
    // Predicated region
    $region2: #{tpu_custom_call.1} parent=1 // pred_check
      _
    $region3: #{tpu_custom_call.1} parent=1 // pred_check_branch
      %14 = sbr.rel (0) target = $region5
    $region4: #{tpu_custom_call.1} parent=1 // pred_region
      %s16 = ssub.s32 256, 64
      %17 = vsyncadd [#allocation3], %s16
      %s18 = sshll.u32 [#allocation2], 4
      %s19 = int_to_ptr.vmem [resolvable:$true] %s18
      %24 = dma.hbm_to_vmem [thread:$0]  %s0, 64, %s19, [#allocation3], 64, 64, 4
    $region5: #{tpu_custom_call.1} parent=1 // pred_fallthru
      _
    // Predicated region
    $region6: #{tpu_custom_call.1} parent=1 // pred_check
      _
    $region7: #{tpu_custom_call.1} parent=1 // pred_check_branch
      %26 = sbr.rel (0) target = $region9
    $region8: #{tpu_custom_call.1} parent=1 // pred_region
      %s28 = ssub.s32 2048, 2048
      %29 = vsyncadd [#allocation6], %s28
      %s30 = sshll.u32 [#allocation5], 4
      %s31 = int_to_ptr.vmem [resolvable:$true] %s30
      %36 = dma.hbm_to_vmem [thread:$0]  %s1, 2048, %s31, [#allocation6], 64, 64, 4
    $region9: #{tpu_custom_call.1} parent=1 // pred_fallthru
      _
    // Predicated region
    $region10: #{tpu_custom_call.1} parent=1 // pred_check
      _
    $region11: #{tpu_custom_call.1} parent=1 // pred_check_branch
      %38 = sbr.rel (0) target = $region13
    $region12: #{tpu_custom_call.1} parent=1 // pred_region
      _
    $region13: #{tpu_custom_call.1} parent=1 // pred_fallthru
      _
    // Predicated region
    $region14: #{tpu_custom_call.1} parent=1 // pred_check
      _
    $region15: #{tpu_custom_call.1} parent=1 // pred_check_branch
      %40 = sbr.rel (0) target = $region17
    $region16: #{tpu_custom_call.1} parent=1 // pred_region
      %s42 = ssub.s32 1024, 1024
      %43 = vsyncadd [#allocation6], %s42
      %s44 = sshll.u32 [#allocation7], 4
      %s45 = int_to_ptr.vmem [resolvable:$true] %s44
      %50 = dma.hbm_to_vmem [thread:$0]  %s3, 1024, %s45, [#allocation6], 64, 64, 4
    $region17: #{tpu_custom_call.1} parent=1 // pred_fallthru
      _
    // Predicated region
    $region18: #{tpu_custom_call.1} parent=1 // pred_check
      _
    $region19: #{tpu_custom_call.1} parent=1 // pred_check_branch
      %52 = sbr.rel (0) target = $region21
    $region20: #{tpu_custom_call.1} parent=1 // pred_region
      _
    $region21: #{tpu_custom_call.1} parent=1 // pred_fallthru
      _
    // Predicated region
    $region22: #{tpu_custom_call.1} parent=1 // pred_check
      _
    $region23: #{tpu_custom_call.1} parent=1 // pred_check_branch
      %54 = sbr.rel (0) target = $region25
    $region24: #{tpu_custom_call.1} parent=1 // pred_region
      %55 = dma.done [#allocation3], 256
    $region25: #{tpu_custom_call.1} parent=1 // pred_fallthru
      _
    // Predicated region
    $region26: #{tpu_custom_call.1} parent=1 // pred_check
      _
    $region27: #{tpu_custom_call.1} parent=1 // pred_check_branch
      %57 = sbr.rel (0) target = $region29
    $region28: #{tpu_custom_call.1} parent=1 // pred_region
      %58 = dma.done [#allocation6], 2048
    $region29: #{tpu_custom_call.1} parent=1 // pred_fallthru
      _
    // Predicated region
    $region30: #{tpu_custom_call.1} parent=1 // pred_check
      _
    $region31: #{tpu_custom_call.1} parent=1 // pred_check_branch
      %60 = sbr.rel (0) target = $region33
    $region32: #{tpu_custom_call.1} parent=1 // pred_region
      %61 = dma.done [#allocation6], 1024
    $region33: #{tpu_custom_call.1} parent=1 // pred_fallthru
      _
    %v63 = vld [vmem:[#allocation2] sm:$0xf]
    %v64 = vld [vmem:[#allocation2 + $0x4] sm:$0xf]
    %v65 = vld [vmem:[#allocation2 + $0x8] sm:$0xf]
    %v66 = vld [vmem:[#allocation2 + $0xc] sm:$0xf]
    %v71 = vcombine.low %v63, %v64
    %v72 = vcombine.low %v65, %v66
    %v74 = vunpack.c.l.s4 1983009808
    %v75 = vunpack.c.0.s8 %v74
    %v76 = vlaneseq
    %v77 = vshrl.u32 %v76, 7
    %v78 = vsub.s32 %v75, %v77
    %v79 = vrot.slane %v71, %v78
    %v81 = vunpack.c.l.s4 1983009808
    %v82 = vunpack.c.0.s8 %v81
    %v83 = vlaneseq
    %v84 = vshrl.u32 %v83, 7
    %v85 = vsub.s32 %v82, %v84
    %v86 = vrot.slane %v72, %v85
    %v87 = vcombine.low %v79, %v86
    %v88 = vcombine.high %v79, %v86
    %v91 = vpack.c.bf16 %v87, %v87
    %v92 = vpack.c.bf16 %v88, %v88
    %v93 = vld [vmem:[#allocation5] sm:$0xf]
    %v94 = vld [vmem:[#allocation5 + $0x4] sm:$0xf]
    %v95 = vld [vmem:[#allocation5 + $0x8] sm:$0xf]
    %v96 = vld [vmem:[#allocation5 + $0xc] sm:$0xf]
    %v97 = vld [vmem:[#allocation5 + $0x10] sm:$0xf]
    %v98 = vld [vmem:[#allocation5 + $0x14] sm:$0xf]
    %v99 = vld [vmem:[#allocation5 + $0x18] sm:$0xf]
    %v100 = vld [vmem:[#allocation5 + $0x1c] sm:$0xf]
    %v101 = vld [vmem:[#allocation5 + $0x20] sm:$0xf]
    %v102 = vld [vmem:[#allocation5 + $0x24] sm:$0xf]
    %v103 = vld [vmem:[#allocation5 + $0x28] sm:$0xf]
    %v104 = vld [vmem:[#allocation5 + $0x2c] sm:$0xf]
    %v105 = vld [vmem:[#allocation5 + $0x30] sm:$0xf]
    %v106 = vld [vmem:[#allocation5 + $0x34] sm:$0xf]
    %v107 = vld [vmem:[#allocation5 + $0x38] sm:$0xf]
    %v108 = vld [vmem:[#allocation5 + $0x3c] sm:$0xf]
    %v109 = vld [vmem:[#allocation5 + $0x40] sm:$0xf]
    %v110 = vld [vmem:[#allocation5 + $0x44] sm:$0xf]
    %v111 = vld [vmem:[#allocation5 + $0x48] sm:$0xf]
    %v112 = vld [vmem:[#allocation5 + $0x4c] sm:$0xf]
    %v113 = vld [vmem:[#allocation5 + $0x50] sm:$0xf]
    %v114 = vld [vmem:[#allocation5 + $0x54] sm:$0xf]
    %v115 = vld [vmem:[#allocation5 + $0x58] sm:$0xf]
    %v116 = vld [vmem:[#allocation5 + $0x5c] sm:$0xf]
    %v117 = vld [vmem:[#allocation5 + $0x60] sm:$0xf]
    %v118 = vld [vmem:[#allocation5 + $0x64] sm:$0xf]
    %v119 = vld [vmem:[#allocation5 + $0x68] sm:$0xf]
    %v120 = vld [vmem:[#allocation5 + $0x6c] sm:$0xf]
    %v121 = vld [vmem:[#allocation5 + $0x70] sm:$0xf]
    %v122 = vld [vmem:[#allocation5 + $0x74] sm:$0xf]
    %v123 = vld [vmem:[#allocation5 + $0x78] sm:$0xf]
    %v124 = vld [vmem:[#allocation5 + $0x7c] sm:$0xf]
    %v125 = vld [vmem:[%s2] sm:$0x1]
    %v127 = vlaneseq
    %v128 = vshrl.u32 %v127, 7
    %v129 = vsub.s32 0, %v128
    %v130 = vrot.slane %v125, %v129
    %v164 = vunpack.c.l.b16 %v93
    %v165 = vunpack.c.l.b16 %v94
    %v166 = vunpack.c.l.b16 %v95
    %v167 = vunpack.c.l.b16 %v96
    %v168 = vunpack.c.l.b16 %v97
    %v169 = vunpack.c.l.b16 %v98
    %v170 = vunpack.c.l.b16 %v99
    %v171 = vunpack.c.l.b16 %v100
    %v172 = vunpack.c.l.b16 %v101
    %v173 = vunpack.c.l.b16 %v102
    %v174 = vunpack.c.l.b16 %v103
    %v175 = vunpack.c.l.b16 %v104
    %v176 = vunpack.c.l.b16 %v105
    %v177 = vunpack.c.l.b16 %v106
    %v178 = vunpack.c.l.b16 %v107
    %v179 = vunpack.c.l.b16 %v108
    %v180 = vunpack.c.l.b16 %v109
    %v181 = vunpack.c.l.b16 %v110
    %v182 = vunpack.c.l.b16 %v111
    %v183 = vunpack.c.l.b16 %v112
    %v184 = vunpack.c.l.b16 %v113
    %v185 = vunpack.c.l.b16 %v114
    %v186 = vunpack.c.l.b16 %v115
    %v187 = vunpack.c.l.b16 %v116
    %v188 = vunpack.c.l.b16 %v117
    %v189 = vunpack.c.l.b16 %v118
    %v190 = vunpack.c.l.b16 %v119
    %v191 = vunpack.c.l.b16 %v120
    %v192 = vunpack.c.l.b16 %v121
    %v193 = vunpack.c.l.b16 %v122
    %v194 = vunpack.c.l.b16 %v123
    %v195 = vunpack.c.l.b16 %v124
    %v196 = vpack.c.b16 %v165, %v164
    %v197 = vpack.c.b16 %v167, %v166
    %v198 = vpack.c.b16 %v169, %v168
    %v199 = vpack.c.b16 %v171, %v170
    %v200 = vpack.c.b16 %v173, %v172
    %v201 = vpack.c.b16 %v175, %v174
    %v202 = vpack.c.b16 %v177, %v176
    %v203 = vpack.c.b16 %v179, %v178
    %v204 = vpack.c.b16 %v181, %v180
    %v205 = vpack.c.b16 %v183, %v182
    %v206 = vpack.c.b16 %v185, %v184
    %v207 = vpack.c.b16 %v187, %v186
    %v208 = vpack.c.b16 %v189, %v188
    %v209 = vpack.c.b16 %v191, %v190
    %v210 = vpack.c.b16 %v193, %v192
    %v211 = vpack.c.b16 %v195, %v194
    %228 = vmatprep.subr.bf16.mxu0 0
    %229 = vmatpush1.bf16.msra.mxu0 %v196
    %230 = vmatprep.subr.bf16.mxu0 0
    %231 = vmatpush1.bf16.msra.mxu0 %v197
    %232 = vmatprep.subr.bf16.mxu0 0
    %233 = vmatpush1.bf16.msra.mxu0 %v198
    %234 = vmatprep.subr.bf16.mxu0 0
    %235 = vmatpush1.bf16.msra.mxu0 %v199
    %236 = vmatprep.subr.bf16.mxu0 0
    %237 = vmatpush1.bf16.msra.mxu0 %v200
    %238 = vmatprep.subr.bf16.mxu0 0
    %239 = vmatpush1.bf16.msra.mxu0 %v201
    %240 = vmatprep.subr.bf16.mxu0 0
    %241 = vmatpush1.bf16.msra.mxu0 %v202
    %242 = vmatprep.subr.bf16.mxu0 0
    %243 = vmatpush1.bf16.msra.mxu0 %v203
    %244 = vmatprep.subr.bf16.mxu0 0
    %245 = vmatpush1.bf16.msra.mxu0 %v204
    %246 = vmatprep.subr.bf16.mxu0 0
    %247 = vmatpush1.bf16.msra.mxu0 %v205
    %248 = vmatprep.subr.bf16.mxu0 0
    %249 = vmatpush1.bf16.msra.mxu0 %v206
    %250 = vmatprep.subr.bf16.mxu0 0
    %251 = vmatpush1.bf16.msra.mxu0 %v207
    %252 = vmatprep.subr.bf16.mxu0 0
    %253 = vmatpush1.bf16.msra.mxu0 %v208
    %254 = vmatprep.subr.bf16.mxu0 0
    %255 = vmatpush1.bf16.msra.mxu0 %v209
    %256 = vmatprep.subr.bf16.mxu0 0
    %257 = vmatpush1.bf16.msra.mxu0 %v210
    %258 = vmatprep.subr.bf16.mxu0 0
    %259 = vmatpush1.bf16.msra.mxu0 %v211
    %260 = vmatprep.mubr.bf16.mxu0 %v92
    %261 = vmatmul.mubr.bf16.gmra.mrb[0].mxu0 %v91
    %v262 = vpop.f32.mrb[0].mxu0
    %v263 = vadd.f32 %v130, %v262
    %v264 = vpop.f32.mrb[0].mxu0
    %v265 = vpop.f32.mrb[0].mxu0
    %v266 = vpop.f32.mrb[0].mxu0
    %267 = vdwg.mxu0
    %v268 = vmax.f32 %v263, 0.0
    %v269 = vpack.c.bf16 %v268, %v268
    %v270 = vld [vmem:[#allocation7] sm:$0xf]
    %v271 = vld [vmem:[#allocation7 + $0x4] sm:$0xf]
    %v272 = vld [vmem:[#allocation7 + $0x8] sm:$0xf]
    %v273 = vld [vmem:[#allocation7 + $0xc] sm:$0xf]
    %v274 = vld [vmem:[#allocation7 + $0x10] sm:$0xf]
    %v275 = vld [vmem:[#allocation7 + $0x14] sm:$0xf]
    %v276 = vld [vmem:[#allocation7 + $0x18] sm:$0xf]
    %v277 = vld [vmem:[#allocation7 + $0x1c] sm:$0xf]
    %v278 = vld [vmem:[#allocation7 + $0x20] sm:$0xf]
    %v279 = vld [vmem:[#allocation7 + $0x24] sm:$0xf]
    %v280 = vld [vmem:[#allocation7 + $0x28] sm:$0xf]
    %v281 = vld [vmem:[#allocation7 + $0x2c] sm:$0xf]
    %v282 = vld [vmem:[#allocation7 + $0x30] sm:$0xf]
    %v283 = vld [vmem:[#allocation7 + $0x34] sm:$0xf]
    %v284 = vld [vmem:[#allocation7 + $0x38] sm:$0xf]
    %v285 = vld [vmem:[#allocation7 + $0x3c] sm:$0xf]
    %v286 = vld [vmem:[%s4] sm:$0x1]
    %v288 = vlaneseq
    %v289 = vshrl.u32 %v288, 7
    %v290 = vsub.s32 0, %v289
    %v291 = vrot.slane %v286, %v290
    %v309 = vunpack.c.l.b16 %v270
    %v310 = vunpack.c.l.b16 %v271
    %v311 = vunpack.c.l.b16 %v272
    %v312 = vunpack.c.l.b16 %v273
    %v313 = vunpack.c.l.b16 %v274
    %v314 = vunpack.c.l.b16 %v275
    %v315 = vunpack.c.l.b16 %v276
    %v316 = vunpack.c.l.b16 %v277
    %v317 = vunpack.c.l.b16 %v278
    %v318 = vunpack.c.l.b16 %v279
    %v319 = vunpack.c.l.b16 %v280
    %v320 = vunpack.c.l.b16 %v281
    %v321 = vunpack.c.l.b16 %v282
    %v322 = vunpack.c.l.b16 %v283
    %v323 = vunpack.c.l.b16 %v284
    %v324 = vunpack.c.l.b16 %v285
    %v325 = vpack.c.b16 %v310, %v309
    %v326 = vpack.c.b16 %v312, %v311
    %v327 = vpack.c.b16 %v314, %v313
    %v328 = vpack.c.b16 %v316, %v315
    %v329 = vpack.c.b16 %v318, %v317
    %v330 = vpack.c.b16 %v320, %v319
    %v331 = vpack.c.b16 %v322, %v321
    %v332 = vpack.c.b16 %v324, %v323
    %341 = vmatprep.subr.bf16.mxu0 0
    %342 = vmatpush1.bf16.msra.mxu0 %v325
    %343 = vmatprep.subr.bf16.mxu0 0
    %344 = vmatpush1.bf16.msra.mxu0 %v326
    %345 = vmatprep.subr.bf16.mxu0 0
    %346 = vmatpush1.bf16.msra.mxu0 %v327
    %347 = vmatprep.subr.bf16.mxu0 0
    %348 = vmatpush1.bf16.msra.mxu0 %v328
    %349 = vmatprep.subr.bf16.mxu0 0
    %350 = vmatpush1.bf16.msra.mxu0 %v329
    %351 = vmatprep.subr.bf16.mxu0 0
    %352 = vmatpush1.bf16.msra.mxu0 %v330
    %353 = vmatprep.subr.bf16.mxu0 0
    %354 = vmatpush1.bf16.msra.mxu0 %v331
    %355 = vmatprep.subr.bf16.mxu0 0
    %356 = vmatpush1.bf16.msra.mxu0 %v332
    %357 = vmatprep.subr.bf16.mxu0 0
    %358 = vmatpush1.bf16.msra.mxu0 0
    %359 = vmatprep.subr.bf16.mxu0 0
    %360 = vmatpush1.bf16.msra.mxu0 0
    %361 = vmatprep.subr.bf16.mxu0 0
    %362 = vmatpush1.bf16.msra.mxu0 0
    %363 = vmatprep.subr.bf16.mxu0 0
    %364 = vmatpush1.bf16.msra.mxu0 0
    %365 = vmatprep.subr.bf16.mxu0 0
    %366 = vmatpush1.bf16.msra.mxu0 0
    %367 = vmatprep.subr.bf16.mxu0 0
    %368 = vmatpush1.bf16.msra.mxu0 0
    %369 = vmatprep.subr.bf16.mxu0 0
    %370 = vmatpush1.bf16.msra.mxu0 0
    %371 = vmatprep.subr.bf16.mxu0 0
    %372 = vmatpush1.bf16.msra.mxu0 0
    %373 = vmatprep.mubr.bf16.mxu0 0
    %374 = vmatmul.mubr.bf16.gmra.mrb[0].mxu0 %v269
    %v375 = vpop.f32.mrb[0].mxu0
    %v376 = vadd.f32 %v291, %v375
    %v377 = vpop.f32.mrb[0].mxu0
    %v378 = vpop.f32.mrb[0].mxu0
    %v379 = vpop.f32.mrb[0].mxu0
    %380 = vdwg.mxu0
    %381 = vst [vmem:[#allocation8] sm:$0xff] %v376
    // Predicated region
    $region34: #{tpu_custom_call.1} parent=1 // pred_check
      _
    $region35: #{tpu_custom_call.1} parent=1 // pred_check_branch
      %383 = sbr.rel (0) target = $region37
    $region36: #{tpu_custom_call.1} parent=1 // pred_region
      %s385 = ssub.s32 128, 32
      %386 = vsyncadd [#allocation4], %s385
      %s387 = sshll.u32 [#allocation8], 4
      %s388 = int_to_ptr.vmem [resolvable:$true] %s387
      %393 = dma.vmem_to_hbm [thread:$0]  %s388, 32, %s5, [#allocation4], 32, 32, 2
    $region37: #{tpu_custom_call.1} parent=1 // pred_fallthru
      _
    // Predicated region
    $region38: #{tpu_custom_call.1} parent=1 // pred_check
      _
    $region39: #{tpu_custom_call.1} parent=1 // pred_check_branch
      %395 = sbr.rel (0) target = $region41
    $region40: #{tpu_custom_call.1} parent=1 // pred_region
      %396 = dma.done [#allocation4], 128
    $region41: #{tpu_custom_call.1} parent=1 // pred_fallthru
      _
    %397 = vsyncpa [#allocation3], 1
    %398 = vsyncpa [#allocation6], 1
    %399 = vsyncpa [#allocation4], 1

</llo_original>
